<compile_context>
chip_gen: v7x
topology: tpu7x:2x2x1
jax: 0.10.0
libtpu: 0.0.40
codegen_flags: <defaults>
</compile_context>

<pallas_src>
import functools

import jax
import jax.numpy as jnp
from jax.experimental import pallas as pl
from jax.experimental.pallas import tpu as pltpu


# ---------------------------------------------------------------------------
# Kernel bodies
# ---------------------------------------------------------------------------

def _gate_from_pooled(avg, mx, w1_ref, w2_ref):
    """sigmoid(fc2(relu(fc1(avg))) + fc2(relu(fc1(max)))) with fused branches.

    avg, mx: (C, 1) f32.  Returns (C, 1) f32 gate.
    """
    c = avg.shape[0]
    # (C, 2) pooled matrix via broadcast + select (no minor-dim concatenate):
    # column 0 = avg, column 1 = max.
    lane = jax.lax.broadcasted_iota(jnp.int32, (c, 2), 1)
    pooled = jnp.where(lane == 0, avg, mx)                           # (C, 2)
    w1 = w1_ref[...].astype(jnp.float32)                             # (C//r, C)
    w2 = w2_ref[...].astype(jnp.float32)                             # (C, C//r)
    h = jnp.maximum(
        jnp.dot(w1, pooled, preferred_element_type=jnp.float32), 0.0)    # (C//r, 2)
    out = jnp.dot(w2, h, preferred_element_type=jnp.float32)         # (C, 2)
    out = jnp.sum(out, axis=-1, keepdims=True)                       # avg + max branch
    return jax.nn.sigmoid(out)                                       # (C, 1)


def _fused_kernel(x_ref, w1_ref, w2_ref, o_ref, *, hw_true, nb):
    """Single-pass kernel: one (nb, C, HW) slab per grid step.

    Per-image math only (no cross-image dependence), so a ragged last batch
    block is safe: garbage OOB images produce garbage gates whose writes are
    discarded on writeback.
    """
    inv_hw = 1.0 / hw_true
    for i in range(nb):                               # nb is small & static
        x = x_ref[i]                                  # (C, HW), native dtype
        # f32-accumulated sum; exact max in the native dtype.  No persistent
        # full-slab f32 copy of x is kept live.
        s = jnp.sum(x, axis=-1, keepdims=True, dtype=jnp.float32)     # (C, 1)
        mx = jnp.max(x, axis=-1, keepdims=True).astype(jnp.float32)   # (C, 1)
        gate = _gate_from_pooled(s * inv_hw, mx, w1_ref, w2_ref)      # (C, 1) f32
        # Gate multiply in the native dtype (no second full-size f32 tensor).
        o_ref[i] = (x * gate.astype(x.dtype)).astype(o_ref.dtype)


def _pool_gate_kernel(x_ref, w1_ref, w2_ref, gate_ref, sum_sc, max_sc, *,
                      hw_true, t_hw, needs_mask):
    """Two-pass fallback, pass 1: streamed pooling + MLP gate.

    grid = (B, cdiv(HW, t_hw)); the HW-tile axis is a reduction ("arbitrary").
    Ragged last tile: OOB columns hold garbage, so mask sum (0) and max (-inf)
    against the GLOBAL column index.
    """
    t = pl.program_id(1)

    @pl.when(t == 0)
    def _init():
        sum_sc[...] = jnp.zeros_like(sum_sc)
        max_sc[...] = jnp.full_like(max_sc, -jnp.inf)

    x = x_ref[0]                                             # (C, t_hw), native
    if needs_mask:
        col = jax.lax.broadcasted_iota(jnp.int32, x.shape, 1) + t * t_hw
        valid = col < hw_true
        x_sum = jnp.where(valid, x, jnp.zeros_like(x))
        x_max = jnp.where(valid, x, jnp.full_like(x, -jnp.inf))
    else:
        x_sum = x
        x_max = x
    sum_sc[...] += jnp.sum(x_sum, axis=-1, keepdims=True, dtype=jnp.float32)
    max_sc[...] = jnp.maximum(
        max_sc[...], jnp.max(x_max, axis=-1, keepdims=True).astype(jnp.float32))

    @pl.when(t == pl.num_programs(1) - 1)
    def _finalize():
        avg = sum_sc[...] * (1.0 / hw_true)
        gate_ref[0] = _gate_from_pooled(avg, max_sc[...], w1_ref, w2_ref)


def _apply_gate_kernel(gate_ref, x_ref, o_ref):
    """Two-pass fallback, pass 2: o = gate * x, fully parallel grid.

    Ragged last tile is fine: garbage OOB columns are multiplied and then
    discarded by the (masked) output writeback.
    """
    x = x_ref[0]                                  # (C, t_hw), native dtype
    g = gate_ref[0].astype(x.dtype)               # (C, 1)
    o_ref[0] = (x * g).astype(o_ref.dtype)


# ---------------------------------------------------------------------------
# Wrapper: VMEM budgeting, batch blocking, grid construction
# ---------------------------------------------------------------------------

def _round_up(x, m):
    return (x + m - 1) // m * m


def _vmem_limit_bytes():
    cap = 64 * 1024 * 1024                 # conservative default = v7x physical VMEM
    try:
        info = pltpu.get_tpu_info()
        cap = int(getattr(info, "vmem_capacity_bytes", cap))
    except Exception:
        pass
    # Leave headroom for Mosaic-internal scratch; never request more than 96 MiB.
    return min(cap * 3 // 4, 96 * 1024 * 1024)


def _pick_tile(budget_bytes, per_lane_bytes, hw, force=None):
    """Lane-tile width: multiple of 128 when tiling, or the (possibly
    unaligned) full HW when a single tile already covers it."""
    if force is not None:
        t = int(force)
    else:
        t = max((budget_bytes // per_lane_bytes) // 128 * 128, 128)
    return hw if t >= hw else t


def channel_attention(x_nchw, w1, w2, *, _force_tile_hw=None,
                      _force_two_pass=False, _force_nb=None):
    """x_nchw: (B, C, H, W); w1: (C//r, C); w2: (C, C//r). Returns (B, C, H, W)."""
    B, C, H, W = x_nchw.shape
    Cr = w1.shape[0]
    HW = H * W
    dsize = jnp.dtype(x_nchw.dtype).itemsize

    sub = _round_up(C, 8)              # physical sublane rows per image
    lanes_img = _round_up(HW, 128)     # physical lane columns per image

    vmem_limit = _vmem_limit_bytes()
    budget = int(vmem_limit * 0.7)     # headroom for Mosaic-internal scratch

    x = x_nchw.reshape(B, C, HW)       # metadata-only reshape; NO padding.

    # --- fused-path feasibility & batch blocking ---------------------------
    img_block_bytes = sub * lanes_img * dsize
    widen_temp = sub * lanes_img * 4 if dsize < 4 else 0     # f32 sum temp (narrow dtypes only)
    # 2x in + 2x out (double-buffered) + 1 elementwise intermediate + widen temp.
    per_image_footprint = 5 * img_block_bytes + widen_temp

    fused = (not _force_two_pass) and per_image_footprint <= budget

    if fused:
        target_block_bytes = 4 * 1024 * 1024       # big enough to sit near HBM roofline
        nb_budget = max(1, budget // per_image_footprint)
        nb_target = max(1, -(-target_block_bytes // img_block_bytes))
        nb = min(B, nb_budget, nb_target, 16)      # cap static unroll
        if _force_nb is not None:
            nb = int(_force_nb)
        grid_b = pl.cdiv(B, nb)

        out = pl.pallas_call(
            functools.partial(_fused_kernel, hw_true=HW, nb=nb),
            out_shape=jax.ShapeDtypeStruct((B, C, HW), x.dtype),
            grid_spec=pltpu.PrefetchScalarGridSpec(
                num_scalar_prefetch=0,
                grid=(grid_b,),
                in_specs=[
                    pl.BlockSpec((nb, C, HW), lambda b: (b, 0, 0)),
                    pl.BlockSpec(w1.shape, lambda b: (0, 0)),
                    pl.BlockSpec(w2.shape, lambda b: (0, 0)),
                ],
                out_specs=pl.BlockSpec((nb, C, HW), lambda b: (b, 0, 0)),
            ),
            compiler_params=pltpu.CompilerParams(
                dimension_semantics=("parallel",),
                vmem_limit_bytes=vmem_limit),
            cost_estimate=pl.CostEstimate(
                flops=int(3 * B * C * HW + 8 * B * C * Cr),
                transcendentals=int(B * C),
                bytes_accessed=int(2 * B * C * HW * dsize + (w1.size + w2.size) * 4)),
        )(x, w1, w2)
        return out.reshape(B, C, H, W)

    # --- two-pass streaming fallback (slab does not fit VMEM) ---------------
    # Pass 1: streamed pooling + sigmoid gate.  Only the input is full-size
    # (the gate output is C x 1), so its tile can be much wider than pass 2's.
    per_lane1 = sub * (2 * dsize + 8)              # 2x in buffers + masking temps
    t1 = _pick_tile(budget, per_lane1, HW, _force_tile_hw)
    n_t1 = pl.cdiv(HW, t1)
    needs_mask1 = (HW % t1) != 0

    gate = pl.pallas_call(
        functools.partial(_pool_gate_kernel, hw_true=HW, t_hw=t1,
                          needs_mask=needs_mask1),
        out_shape=jax.ShapeDtypeStruct((B, C, 1), jnp.float32),
        grid_spec=pltpu.PrefetchScalarGridSpec(
            num_scalar_prefetch=0,
            grid=(B, n_t1),
            in_specs=[
                pl.BlockSpec((1, C, t1), lambda b, t: (b, 0, t)),
                pl.BlockSpec(w1.shape, lambda b, t: (0, 0)),
                pl.BlockSpec(w2.shape, lambda b, t: (0, 0)),
            ],
            out_specs=pl.BlockSpec((1, C, 1), lambda b, t: (b, 0, 0)),
            scratch_shapes=[pltpu.VMEM((C, 1), jnp.float32),
                            pltpu.VMEM((C, 1), jnp.float32)],
        ),
        compiler_params=pltpu.CompilerParams(
            dimension_semantics=("parallel", "arbitrary"),
            vmem_limit_bytes=vmem_limit),
        cost_estimate=pl.CostEstimate(
            flops=int(2 * B * C * HW + 8 * B * C * Cr),
            transcendentals=int(B * C),
            bytes_accessed=int(B * C * HW * dsize + (w1.size + w2.size) * 4)),
    )(x, w1, w2)

    # Pass 2: apply gate; fully parallel 2-D grid (feeds both TCs on v7x even
    # for B=1).  Budgeted separately (in + out full-size).
    per_lane2 = sub * 5 * dsize                    # 2x in + 2x out + intermediate
    t2 = _pick_tile(budget, per_lane2, HW, _force_tile_hw)
    n_t2 = pl.cdiv(HW, t2)

    out = pl.pallas_call(
        _apply_gate_kernel,
        out_shape=jax.ShapeDtypeStruct((B, C, HW), x.dtype),
        grid_spec=pltpu.PrefetchScalarGridSpec(
            num_scalar_prefetch=0,
            grid=(B, n_t2),
            in_specs=[
                pl.BlockSpec((1, C, 1), lambda b, t: (b, 0, 0)),
                pl.BlockSpec((1, C, t2), lambda b, t: (b, 0, t)),
            ],
            out_specs=pl.BlockSpec((1, C, t2), lambda b, t: (b, 0, t)),
        ),
        compiler_params=pltpu.CompilerParams(
            dimension_semantics=("parallel", "parallel"),
            vmem_limit_bytes=vmem_limit),
        cost_estimate=pl.CostEstimate(
            flops=int(B * C * HW),
            transcendentals=0,
            bytes_accessed=int(2 * B * C * HW * dsize + B * C * 4)),
    )(gate, x)

    return out.reshape(B, C, H, W)


# ---------------------------------------------------------------------------
# Pure-JAX reference and self-test
# ---------------------------------------------------------------------------

def _reference(x, w1, w2):
    avg = jnp.mean(x, axis=(2, 3))                          # (B, C)
    mx = jnp.max(x, axis=(2, 3))                            # (B, C)

    def branch(p):
        h = jnp.maximum(p @ w1.T, 0.0)                      # (B, C//r)
        return h @ w2.T                                     # (B, C)

    gate = jax.nn.sigmoid(branch(avg) + branch(mx))         # (B, C)
    return gate[:, :, None, None] * x


if __name__ == "__main__":
    key = jax.random.PRNGKey(0)
    k_x, k_w1, k_w2, k_x2, k_x3, k_x4 = jax.random.split(key, 6)

    B, C, ratio = 2, 16, 8
    hidden = C // ratio  # 2

    # Synthetic weights (shapes from nn.Conv2d(C, C//r, 1, bias=False)).
    w1 = jax.random.normal(k_w1, (hidden, C), dtype=jnp.float32) * 0.1
    w2 = jax.random.normal(k_w2, (C, hidden), dtype=jnp.float32) * 0.1

    # Case A: 128-aligned spatial (H*W = 256) -> fused path, nb-blocked batch.
    x_a = jax.random.normal(k_x, (B, C, 16, 16), dtype=jnp.float32)
    y_a = channel_attention(x_a, w1, w2)
    jax.block_until_ready(y_a)
    assert jnp.allclose(y_a, _reference(x_a, w1, w2), atol=1e-5, rtol=1e-5), "A mismatch"

    # Case B: same inputs through the two-pass streaming fallback (2 even HW tiles).
    y_b = channel_attention(x_a, w1, w2, _force_tile_hw=128, _force_two_pass=True)
    jax.block_until_ready(y_b)
    assert jnp.allclose(y_b, _reference(x_a, w1, w2), atol=1e-5, rtol=1e-5), "B mismatch"

    # Case C: non-128-multiple spatial (H*W = 100), fused path, no padding.
    x_c = jax.random.normal(k_x2, (B, C, 10, 10), dtype=jnp.float32)
    y_c = channel_attention(x_c, w1, w2)
    jax.block_until_ready(y_c)
    assert jnp.allclose(y_c, _reference(x_c, w1, w2), atol=1e-5, rtol=1e-5), "C mismatch"

    # Case D: H*W = 144 through the two-pass fallback with a ragged last tile
    # (tile 128 -> second tile has 16 valid + 112 masked columns).
    x_d = jax.random.normal(k_x3, (B, C, 12, 12), dtype=jnp.float32)
    y_d = channel_attention(x_d, w1, w2, _force_tile_hw=128, _force_two_pass=True)
    jax.block_until_ready(y_d)
    assert jnp.allclose(y_d, _reference(x_d, w1, w2), atol=1e-5, rtol=1e-5), "D mismatch"

    # Case E: same non-aligned shape through the fused path.
    y_e = channel_attention(x_d, w1, w2)
    jax.block_until_ready(y_e)
    assert jnp.allclose(y_e, _reference(x_d, w1, w2), atol=1e-5, rtol=1e-5), "E mismatch"

    # Case F: B=3 with forced nb=2 -> ragged last batch block (discarded OOB image).
    x_f = jax.random.normal(k_x4, (3, C, 16, 16), dtype=jnp.float32)
    y_f = channel_attention(x_f, w1, w2, _force_nb=2)
    jax.block_until_ready(y_f)
    assert jnp.allclose(y_f, _reference(x_f, w1, w2), atol=1e-5, rtol=1e-5), "F mismatch"

    print("KERNEL_OK")
</pallas_src>

<mosaic_0001>
module attributes {stable_mosaic.version = 11 : i64} {
  func.func @_fused_kernel(%arg0: i32, %arg1: memref<2x16x256xf32, #tpu.memory_space<vmem>>, %arg2: memref<2x16xf32, #tpu.memory_space<vmem>>, %arg3: memref<16x2xf32, #tpu.memory_space<vmem>>, %arg4: memref<2x16x256xf32, #tpu.memory_space<vmem>>) attributes {dimension_semantics = [#tpu.dimension_semantics<parallel>], iteration_bounds = array<i64: 1>, scalar_prefetch = 0 : i64, scratch_operands = 0 : i64, tpu.core_type = #tpu.core_type<tc>, window_params = [{transform_indices = @transform_0, window_bounds = array<i64: 2, 16, 256>}, {pipeline_mode = #tpu.pipeline_mode<synchronous>, transform_indices = @transform_1, window_bounds = array<i64: 2, 16>}, {pipeline_mode = #tpu.pipeline_mode<synchronous>, transform_indices = @transform_2, window_bounds = array<i64: 16, 2>}, {transform_indices = @transform_3, window_bounds = array<i64: 2, 16, 256>}]} {
    %c0 = arith.constant 0 : index
    %c0_0 = arith.constant 0 : index
    %c0_1 = arith.constant 0 : index
    %0 = vector.load %arg1[%c0, %c0_0, %c0_1] : memref<2x16x256xf32, #tpu.memory_space<vmem>>, vector<1x16x256xf32>
    %1 = vector.shape_cast %0 : vector<1x16x256xf32> to vector<16x256xf32>
    %cst = arith.constant dense<0.000000e+00> : vector<16xf32>
    %2 = vector.multi_reduction <add>, %1, %cst [1] : vector<16x256xf32> to vector<16xf32>
    %3 = vector.shape_cast %2 : vector<16xf32> to vector<16x1xf32>
    %cst_2 = arith.constant dense<0xFF800000> : vector<16xf32>
    %4 = vector.multi_reduction <maximumf>, %1, %cst_2 [1] : vector<16x256xf32> to vector<16xf32>
    %5 = vector.shape_cast %4 : vector<16xf32> to vector<16x1xf32>
    %cst_3 = arith.constant 3.906250e-03 : f32
    %6 = vector.broadcast %cst_3 : f32 to vector<16x1xf32>
    %7 = arith.mulf %3, %6 : vector<16x1xf32>
    %8 = tpu.iota {dimensions = array<i32: 1>} : vector<16x2xi32>
    %c0_i32 = arith.constant 0 : i32
    %9 = vector.broadcast %c0_i32 : i32 to vector<16x2xi32>
    %10 = arith.cmpi eq, %8, %9 : vector<16x2xi32>
    %11 = vector.shape_cast %7 : vector<16x1xf32> to vector<16x1xf32>
    %12 = vector.broadcast %11 : vector<16x1xf32> to vector<16x2xf32>
    %13 = vector.shape_cast %5 : vector<16x1xf32> to vector<16x1xf32>
    %14 = vector.broadcast %13 : vector<16x1xf32> to vector<16x2xf32>
    %15 = arith.select %10, %12, %14 : vector<16x2xi1>, vector<16x2xf32>
    %c0_4 = arith.constant 0 : index
    %c0_5 = arith.constant 0 : index
    %16 = vector.load %arg2[%c0_4, %c0_5] : memref<2x16xf32, #tpu.memory_space<vmem>>, vector<2x16xf32>
    %c0_6 = arith.constant 0 : index
    %c0_7 = arith.constant 0 : index
    %17 = vector.load %arg3[%c0_6, %c0_7] : memref<16x2xf32, #tpu.memory_space<vmem>>, vector<16x2xf32>
    %cst_8 = arith.constant dense<0.000000e+00> : vector<2x2xf32>
    %18 = tpu.matmul %16, %15, %cst_8 {dimension_numbers = #tpu.dot_dimension_numbers<[1], [0], [0], [1], [0, 0, 1, 1], [], []>} : vector<2x16xf32>, vector<16x2xf32>, vector<2x2xf32> -> vector<2x2xf32>
    %cst_9 = arith.constant 0.000000e+00 : f32
    %19 = vector.broadcast %cst_9 : f32 to vector<2x2xf32>
    %20 = arith.maximumf %18, %19 : vector<2x2xf32>
    %cst_10 = arith.constant dense<0.000000e+00> : vector<16x2xf32>
    %21 = tpu.matmul %17, %20, %cst_10 {dimension_numbers = #tpu.dot_dimension_numbers<[1], [0], [0], [1], [0, 0, 1, 1], [], []>} : vector<16x2xf32>, vector<2x2xf32>, vector<16x2xf32> -> vector<16x2xf32>
    %cst_11 = arith.constant dense<0.000000e+00> : vector<16xf32>
    %22 = vector.multi_reduction <add>, %21, %cst_11 [1] : vector<16x2xf32> to vector<16xf32>
    %23 = vector.shape_cast %22 : vector<16xf32> to vector<16x1xf32>
    %24 = arith.negf %23 : vector<16x1xf32>
    %25 = math.exp %24 : vector<16x1xf32>
    %cst_12 = arith.constant 1.000000e+00 : f32
    %26 = vector.broadcast %cst_12 : f32 to vector<16x1xf32>
    %27 = arith.addf %26, %25 : vector<16x1xf32>
    %28 = arith.divf %26, %27 : vector<16x1xf32>
    %29 = vector.broadcast %28 : vector<16x1xf32> to vector<16x256xf32>
    %30 = arith.mulf %1, %29 : vector<16x256xf32>
    %c0_13 = arith.constant 0 : index
    %c0_14 = arith.constant 0 : index
    %c0_15 = arith.constant 0 : index
    %31 = vector.load %arg4[%c0_13, %c0_14, %c0_15] : memref<2x16x256xf32, #tpu.memory_space<vmem>>, vector<1x16x256xf32>
    %32 = vector.shape_cast %31 : vector<1x16x256xf32> to vector<16x256xf32>
    %33 = vector.shape_cast %30 : vector<16x256xf32> to vector<1x16x256xf32>
    tpu.vector_store %arg4[%c0_13, %c0_14, %c0_15], %33 {strides = array<i32>} : memref<2x16x256xf32, #tpu.memory_space<vmem>>, vector<1x16x256xf32>,
    %c1 = arith.constant 1 : index
    %c0_16 = arith.constant 0 : index
    %c0_17 = arith.constant 0 : index
    %34 = vector.load %arg1[%c1, %c0_16, %c0_17] : memref<2x16x256xf32, #tpu.memory_space<vmem>>, vector<1x16x256xf32>
    %35 = vector.shape_cast %34 : vector<1x16x256xf32> to vector<16x256xf32>
    %cst_18 = arith.constant dense<0.000000e+00> : vector<16xf32>
    %36 = vector.multi_reduction <add>, %35, %cst_18 [1] : vector<16x256xf32> to vector<16xf32>
    %37 = vector.shape_cast %36 : vector<16xf32> to vector<16x1xf32>
    %cst_19 = arith.constant dense<0xFF800000> : vector<16xf32>
    %38 = vector.multi_reduction <maximumf>, %35, %cst_19 [1] : vector<16x256xf32> to vector<16xf32>
    %39 = vector.shape_cast %38 : vector<16xf32> to vector<16x1xf32>
    %cst_20 = arith.constant 3.906250e-03 : f32
    %40 = vector.broadcast %cst_20 : f32 to vector<16x1xf32>
    %41 = arith.mulf %37, %40 : vector<16x1xf32>
    %42 = tpu.iota {dimensions = array<i32: 1>} : vector<16x2xi32>
    %c0_i32_21 = arith.constant 0 : i32
    %43 = vector.broadcast %c0_i32_21 : i32 to vector<16x2xi32>
    %44 = arith.cmpi eq, %42, %43 : vector<16x2xi32>
    %45 = vector.shape_cast %41 : vector<16x1xf32> to vector<16x1xf32>
    %46 = vector.broadcast %45 : vector<16x1xf32> to vector<16x2xf32>
    %47 = vector.shape_cast %39 : vector<16x1xf32> to vector<16x1xf32>
    %48 = vector.broadcast %47 : vector<16x1xf32> to vector<16x2xf32>
    %49 = arith.select %44, %46, %48 : vector<16x2xi1>, vector<16x2xf32>
    %c0_22 = arith.constant 0 : index
    %c0_23 = arith.constant 0 : index
    %50 = vector.load %arg2[%c0_22, %c0_23] : memref<2x16xf32, #tpu.memory_space<vmem>>, vector<2x16xf32>
    %c0_24 = arith.constant 0 : index
    %c0_25 = arith.constant 0 : index
    %51 = vector.load %arg3[%c0_24, %c0_25] : memref<16x2xf32, #tpu.memory_space<vmem>>, vector<16x2xf32>
    %cst_26 = arith.constant dense<0.000000e+00> : vector<2x2xf32>
    %52 = tpu.matmul %50, %49, %cst_26 {dimension_numbers = #tpu.dot_dimension_numbers<[1], [0], [0], [1], [0, 0, 1, 1], [], []>} : vector<2x16xf32>, vector<16x2xf32>, vector<2x2xf32> -> vector<2x2xf32>
    %cst_27 = arith.constant 0.000000e+00 : f32
    %53 = vector.broadcast %cst_27 : f32 to vector<2x2xf32>
    %54 = arith.maximumf %52, %53 : vector<2x2xf32>
    %cst_28 = arith.constant dense<0.000000e+00> : vector<16x2xf32>
    %55 = tpu.matmul %51, %54, %cst_28 {dimension_numbers = #tpu.dot_dimension_numbers<[1], [0], [0], [1], [0, 0, 1, 1], [], []>} : vector<16x2xf32>, vector<2x2xf32>, vector<16x2xf32> -> vector<16x2xf32>
    %cst_29 = arith.constant dense<0.000000e+00> : vector<16xf32>
    %56 = vector.multi_reduction <add>, %55, %cst_29 [1] : vector<16x2xf32> to vector<16xf32>
    %57 = vector.shape_cast %56 : vector<16xf32> to vector<16x1xf32>
    %58 = arith.negf %57 : vector<16x1xf32>
    %59 = math.exp %58 : vector<16x1xf32>
    %cst_30 = arith.constant 1.000000e+00 : f32
    %60 = vector.broadcast %cst_30 : f32 to vector<16x1xf32>
    %61 = arith.addf %60, %59 : vector<16x1xf32>
    %62 = arith.divf %60, %61 : vector<16x1xf32>
    %63 = vector.broadcast %62 : vector<16x1xf32> to vector<16x256xf32>
    %64 = arith.mulf %35, %63 : vector<16x256xf32>
    %c1_31 = arith.constant 1 : index
    %c0_32 = arith.constant 0 : index
    %c0_33 = arith.constant 0 : index
    %65 = vector.load %arg4[%c1_31, %c0_32, %c0_33] : memref<2x16x256xf32, #tpu.memory_space<vmem>>, vector<1x16x256xf32>
    %66 = vector.shape_cast %65 : vector<1x16x256xf32> to vector<16x256xf32>
    %67 = vector.shape_cast %64 : vector<16x256xf32> to vector<1x16x256xf32>
    tpu.vector_store %arg4[%c1_31, %c0_32, %c0_33], %67 {strides = array<i32>} : memref<2x16x256xf32, #tpu.memory_space<vmem>>, vector<1x16x256xf32>,
    return
  }
  func.func @transform_0(%arg0: i32) -> (i32, i32, i32) {
    %c0_i32 = arith.constant 0 : i32
    %c0_i32_0 = arith.constant 0 : i32
    %c0_i32_1 = arith.constant 0 : i32
    return %arg0, %c0_i32, %c0_i32_0 : i32, i32, i32
  }
  func.func @transform_1(%arg0: i32) -> (i32, i32) {
    %c0_i32 = arith.constant 0 : i32
    %c0_i32_0 = arith.constant 0 : i32
    %c0_i32_1 = arith.constant 0 : i32
    return %c0_i32, %c0_i32_0 : i32, i32
  }
  func.func @transform_2(%arg0: i32) -> (i32, i32) {
    %c0_i32 = arith.constant 0 : i32
    %c0_i32_0 = arith.constant 0 : i32
    %c0_i32_1 = arith.constant 0 : i32
    return %c0_i32, %c0_i32_0 : i32, i32
  }
  func.func @transform_3(%arg0: i32) -> (i32, i32, i32) {
    %c0_i32 = arith.constant 0 : i32
    %c0_i32_0 = arith.constant 0 : i32
    %c0_i32_1 = arith.constant 0 : i32
    return %arg0, %c0_i32, %c0_i32_0 : i32, i32, i32
  }
}

</mosaic_0001>

<llo_original>
// kernel: tpu_custom_call.1
$region0: #{tpu_custom_call.1}
  #allocation0 [shape = 'u32[]', space=smem, size = 0x4, offset = 0x4, fixed_abs, tag = 'smem constant byte address 0x4 - core index']
  #allocation1 [shape = 'u32[144,128]{1,0:T(1,128)}', space=vmem, size = 0x12000, scoped, tag = 'internal scratch']
  %s0 = inlined_call_operand.hbm [shape: f32[2,16,256], index: 0, kind: input, shape index: {}]
  %s1 = inlined_call_operand.vmem [shape: f32[2,16], index: 1, kind: input, shape index: {}]
  %s2 = inlined_call_operand.vmem [shape: f32[16,2], index: 2, kind: input, shape index: {}]
  %s3 = inlined_call_operand.hbm [shape: f32[2,16,256], index: 3, kind: output, shape index: {}]
  %s4 = sld [smem:[#allocation0]]
  $region26: #{tpu_custom_call.1} parent=0
    _
  %s6 = ssub.s32 1, %s4
  %s7 = scalar_select 0, %s6, %s4
  $region1: #{tpu_custom_call.1} parent=0
    #allocation2 [shape = 'u8[32768]{0}', space=vmem, size = 0x8000, scoped, tag = 'input window, operand 0, single buffered']
    #allocation3 [shape = 's32[1]{0}', space=sflag, size = 0x4, scoped, tag = 'scoped memory for tpu_custom_call.1']
    #allocation4 [shape = 's32[1]{0}', space=sflag, size = 0x4, scoped, tag = 'scoped memory for tpu_custom_call.1']
    #allocation5 [shape = 'u8[32768]{0}', space=vmem, size = 0x8000, scoped, tag = 'output window, operand 0, single buffered']
    %8 = vsyncpa [#allocation3], 0
    %9 = vsyncpa [#allocation4], 0
    // Predicated region
    $region2: #{tpu_custom_call.1} parent=1 // pred_check
      _
    $region3: #{tpu_custom_call.1} parent=1 // pred_check_branch
      %11 = sbr.rel (0) target = $region5
    $region4: #{tpu_custom_call.1} parent=1 // pred_region
      %s13 = ssub.s32 1024, 1024
      %14 = vsyncadd [#allocation3], %s13
      %s15 = sshll.u32 [#allocation2], 4
      %s16 = int_to_ptr.vmem [resolvable:$true] %s15
      %21 = dma.hbm_to_vmem [thread:$0]  %s0, 1024, %s16, [#allocation3], 256, 256, 16
    $region5: #{tpu_custom_call.1} parent=1 // pred_fallthru
      _
    // Predicated region
    $region6: #{tpu_custom_call.1} parent=1 // pred_check
      _
    $region7: #{tpu_custom_call.1} parent=1 // pred_check_branch
      %23 = sbr.rel (0) target = $region9
    $region8: #{tpu_custom_call.1} parent=1 // pred_region
      _
    $region9: #{tpu_custom_call.1} parent=1 // pred_fallthru
      _
    // Predicated region
    $region10: #{tpu_custom_call.1} parent=1 // pred_check
      _
    $region11: #{tpu_custom_call.1} parent=1 // pred_check_branch
      %25 = sbr.rel (0) target = $region13
    $region12: #{tpu_custom_call.1} parent=1 // pred_region
      _
    $region13: #{tpu_custom_call.1} parent=1 // pred_fallthru
      _
    // Predicated region
    $region14: #{tpu_custom_call.1} parent=1 // pred_check
      _
    $region15: #{tpu_custom_call.1} parent=1 // pred_check_branch
      %27 = sbr.rel (0) target = $region17
    $region16: #{tpu_custom_call.1} parent=1 // pred_region
      %28 = dma.done [#allocation3], 1024
    $region17: #{tpu_custom_call.1} parent=1 // pred_fallthru
      _
    %v29 = vld [vmem:[#allocation2] sm:$0xff]
    %v30 = vld [vmem:[#allocation2 + $0x8] sm:$0xff]
    %v31 = vld [vmem:[#allocation2 + $0x10] sm:$0xff]
    %v32 = vld [vmem:[#allocation2 + $0x18] sm:$0xff]
    %v33 = vadd.f32 %v29, %v30
    %34 = vadd.xlane.f32.xlu0 %v33
    %v35 = vpop.xlane.xlu0 %34
    %v36 = vadd.f32 %v31, %v32
    %37 = vadd.xlane.f32.xlu0 %v36
    %v38 = vpop.xlane.xlu0 %37
    %v39 = vmax.f32 %v29, %v30
    %40 = vmax.xlane.f32.xlu0 %v39
    %v41 = vpop.xlane.xlu0 %40
    %v42 = vmax.f32 %v31, %v32
    %43 = vmax.xlane.f32.xlu0 %v42
    %v44 = vpop.xlane.xlu0 %43
    %v45 = vmul.f32 %v35, 0.00390625
    %v46 = vmul.f32 %v38, 0.00390625
    %v47 = vlaneseq
    %v48 = vand.u32 %v47, 127
    %vm49 = vcmp.eq.s32.totalorder %v48, 0
    %v50 = vsel %vm49, %v45, %v41
    %v51 = vsel %vm49, %v46, %v44
    %v52 = vld [vmem:[%s1] sm:$0x3]
    %v53 = vld [vmem:[%s2] sm:$0xff]
    %v54 = vld [vmem:[%s2 + $0x8] sm:$0xff]
    %vm55 = vcmask 130048
    %v57 = vsel %vm55, %v52, 0
    %59 = vmatprep.subr.mxu0 0.0
    %60 = vmatpush1.msra.mxu0 %v50
    %61 = vmatprep.subr.mxu0 0.0
    %62 = vmatpush1.msra.mxu0 %v51
    %63 = vmatprep.subr.mxu0 0.0
    %64 = vmatpush1.msra.mxu0 0.0
    %65 = vmatprep.subr.mxu0 0.0
    %66 = vmatpush1.msra.mxu0 0.0
    %67 = vmatprep.subr.mxu0 0.0
    %68 = vmatpush1.msra.mxu0 0.0
    %69 = vmatprep.subr.mxu0 0.0
    %70 = vmatpush1.msra.mxu0 0.0
    %71 = vmatprep.subr.mxu0 0.0
    %72 = vmatpush1.msra.mxu0 0.0
    %73 = vmatprep.subr.mxu0 0.0
    %74 = vmatpush1.msra.mxu0 0.0
    %75 = vmatprep.subr.mxu0 0.0
    %76 = vmatpush1.msra.mxu0 0.0
    %77 = vmatprep.subr.mxu0 0.0
    %78 = vmatpush1.msra.mxu0 0.0
    %79 = vmatprep.subr.mxu0 0.0
    %80 = vmatpush1.msra.mxu0 0.0
    %81 = vmatprep.subr.mxu0 0.0
    %82 = vmatpush1.msra.mxu0 0.0
    %83 = vmatprep.subr.mxu0 0.0
    %84 = vmatpush1.msra.mxu0 0.0
    %85 = vmatprep.subr.mxu0 0.0
    %86 = vmatpush1.msra.mxu0 0.0
    %87 = vmatprep.subr.mxu0 0.0
    %88 = vmatpush1.msra.mxu0 0.0
    %89 = vmatprep.subr.mxu0 0.0
    %90 = vmatpush1.msra.mxu0 0.0
    %91 = vmatprep.subr.mxu0 0.0
    %92 = vmatpush1.msra.mxu0 0.0
    %93 = vmatprep.subr.mxu0 0.0
    %94 = vmatpush1.msra.mxu0 0.0
    %95 = vmatprep.subr.mxu0 0.0
    %96 = vmatpush1.msra.mxu0 0.0
    %97 = vmatprep.subr.mxu0 0.0
    %98 = vmatpush1.msra.mxu0 0.0
    %99 = vmatprep.subr.mxu0 0.0
    %100 = vmatpush1.msra.mxu0 0.0
    %101 = vmatprep.subr.mxu0 0.0
    %102 = vmatpush1.msra.mxu0 0.0
    %103 = vmatprep.subr.mxu0 0.0
    %104 = vmatpush1.msra.mxu0 0.0
    %105 = vmatprep.subr.mxu0 0.0
    %106 = vmatpush1.msra.mxu0 0.0
    %107 = vmatprep.subr.mxu0 0.0
    %108 = vmatpush1.msra.mxu0 0.0
    %109 = vmatprep.subr.mxu0 0.0
    %110 = vmatpush1.msra.mxu0 0.0
    %111 = vmatprep.subr.mxu0 0.0
    %112 = vmatpush1.msra.mxu0 0.0
    %113 = vmatprep.subr.mxu0 0.0
    %114 = vmatpush1.msra.mxu0 0.0
    %115 = vmatprep.subr.mxu0 0.0
    %116 = vmatpush1.msra.mxu0 0.0
    %117 = vmatprep.subr.mxu0 0.0
    %118 = vmatpush1.msra.mxu0 0.0
    %119 = vmatprep.subr.mxu0 0.0
    %120 = vmatpush1.msra.mxu0 0.0
    %121 = vmatprep.subr.mxu0 0.0
    %122 = vmatpush1.msra.mxu0 0.0
    %123 = vmatprep.mubr.f32.mxu0 0.0
    %124 = vmatmul.mubr.f32.gmra.mrb[0].mxu0 %v57
    %v125 = vpop.f32.mrb[0].mxu0
    %v126 = vadd.f32 0.0, %v125
    %v127 = vpop.f32.mrb[0].mxu0
    %128 = vdwg.mxu0
    %v129 = vmax.f32 %v126, 0.0
    %vm130 = vcmask 15360
    %v132 = vsel %vm130, %v53, 0
    %v135 = vsel %vm130, %v54, 0
    %vm137 = vcmask 1041408
    %v139 = vsel %vm137, %v129, 0
    %141 = vmatprep.subr.mxu0 0.0
    %142 = vmatpush1.msra.mxu0 %v139
    %143 = vmatprep.subr.mxu0 0.0
    %144 = vmatpush1.msra.mxu0 0.0
    %145 = vmatprep.subr.mxu0 0.0
    %146 = vmatpush1.msra.mxu0 0.0
    %147 = vmatprep.subr.mxu0 0.0
    %148 = vmatpush1.msra.mxu0 0.0
    %149 = vmatprep.subr.mxu0 0.0
    %150 = vmatpush1.msra.mxu0 0.0
    %151 = vmatprep.subr.mxu0 0.0
    %152 = vmatpush1.msra.mxu0 0.0
    %153 = vmatprep.subr.mxu0 0.0
    %154 = vmatpush1.msra.mxu0 0.0
    %155 = vmatprep.subr.mxu0 0.0
    %156 = vmatpush1.msra.mxu0 0.0
    %157 = vmatprep.subr.mxu0 0.0
    %158 = vmatpush1.msra.mxu0 0.0
    %159 = vmatprep.subr.mxu0 0.0
    %160 = vmatpush1.msra.mxu0 0.0
    %161 = vmatprep.subr.mxu0 0.0
    %162 = vmatpush1.msra.mxu0 0.0
    %163 = vmatprep.subr.mxu0 0.0
    %164 = vmatpush1.msra.mxu0 0.0
    %165 = vmatprep.subr.mxu0 0.0
    %166 = vmatpush1.msra.mxu0 0.0
    %167 = vmatprep.subr.mxu0 0.0
    %168 = vmatpush1.msra.mxu0 0.0
    %169 = vmatprep.subr.mxu0 0.0
    %170 = vmatpush1.msra.mxu0 0.0
    %171 = vmatprep.subr.mxu0 0.0
    %172 = vmatpush1.msra.mxu0 0.0
    %173 = vmatprep.subr.mxu0 0.0
    %174 = vmatpush1.msra.mxu0 0.0
    %175 = vmatprep.subr.mxu0 0.0
    %176 = vmatpush1.msra.mxu0 0.0
    %177 = vmatprep.subr.mxu0 0.0
    %178 = vmatpush1.msra.mxu0 0.0
    %179 = vmatprep.subr.mxu0 0.0
    %180 = vmatpush1.msra.mxu0 0.0
    %181 = vmatprep.subr.mxu0 0.0
    %182 = vmatpush1.msra.mxu0 0.0
    %183 = vmatprep.subr.mxu0 0.0
    %184 = vmatpush1.msra.mxu0 0.0
    %185 = vmatprep.subr.mxu0 0.0
    %186 = vmatpush1.msra.mxu0 0.0
    %187 = vmatprep.subr.mxu0 0.0
    %188 = vmatpush1.msra.mxu0 0.0
    %189 = vmatprep.subr.mxu0 0.0
    %190 = vmatpush1.msra.mxu0 0.0
    %191 = vmatprep.subr.mxu0 0.0
    %192 = vmatpush1.msra.mxu0 0.0
    %193 = vmatprep.subr.mxu0 0.0
    %194 = vmatpush1.msra.mxu0 0.0
    %195 = vmatprep.subr.mxu0 0.0
    %196 = vmatpush1.msra.mxu0 0.0
    %197 = vmatprep.subr.mxu0 0.0
    %198 = vmatpush1.msra.mxu0 0.0
    %199 = vmatprep.subr.mxu0 0.0
    %200 = vmatpush1.msra.mxu0 0.0
    %201 = vmatprep.subr.mxu0 0.0
    %202 = vmatpush1.msra.mxu0 0.0
    %203 = vmatprep.subr.mxu0 0.0
    %204 = vmatpush1.msra.mxu0 0.0
    %205 = vmatprep.mubr.f32.mxu0 0.0
    %206 = vmatmul.mubr.f32.gmra.mrb[0].mxu0 %v132
    %v207 = vpop.f32.mrb[0].mxu0
    %v208 = vadd.f32 0.0, %v207
    %v209 = vpop.f32.mrb[0].mxu0
    %210 = vmatprep.mubr.f32.mxu0 0.0
    %211 = vmatmul.mubr.f32.gmra.mrb[0].mxu0 %v135
    %v212 = vpop.f32.mrb[0].mxu0
    %v213 = vadd.f32 0.0, %v212
    %v214 = vpop.f32.mrb[0].mxu0
    %215 = vdwg.mxu0
    %v216 = vsel %vm130, %v208, 0.0
    %217 = vadd.xlane.f32.xlu0 %v216
    %v218 = vpop.xlane.xlu0 %217
    %v219 = vsel %vm130, %v213, 0.0
    %220 = vadd.xlane.f32.xlu0 %v219
    %v221 = vpop.xlane.xlu0 %220
    %v222 = vxor.u32 %v218, 2147483648
    %v223 = vxor.u32 %v221, 2147483648
    %v224 = vmul.f32 %v222, 1.442695
    %v225 = vpow.pop %v224
    %v226 = vmul.f32 %v223, 1.442695
    %v227 = vpow.pop %v226
    %v228 = vadd.f32 %v225, 1.0
    %v229 = vadd.f32 %v227, 1.0
    %v230 = vrcp.pop %v228
    %v231 = vmul.f32 1.0, %v230
    %v232 = vrcp.pop %v229
    %v233 = vmul.f32 1.0, %v232
    %v234 = vmul.f32 %v29, %v231
    %v235 = vmul.f32 %v30, %v231
    %v236 = vmul.f32 %v31, %v233
    %v237 = vmul.f32 %v32, %v233
    %238 = vst [vmem:[#allocation5] sm:$0xff] %v234
    %239 = vst [vmem:[#allocation5 + $0x8] sm:$0xff] %v235
    %240 = vst [vmem:[#allocation5 + $0x10] sm:$0xff] %v236
    %241 = vst [vmem:[#allocation5 + $0x18] sm:$0xff] %v237
    %s242 = scalar_lea.vmem [#allocation2], 32
    %v243 = vld [vmem:[%s242] sm:$0xff]
    %v244 = vld [vmem:[%s242 + $0x8] sm:$0xff]
    %v245 = vld [vmem:[%s242 + $0x10] sm:$0xff]
    %v246 = vld [vmem:[%s242 + $0x18] sm:$0xff]
    %v247 = vadd.f32 %v243, %v244
    %248 = vadd.xlane.f32.xlu0 %v247
    %v249 = vpop.xlane.xlu0 %248
    %v250 = vadd.f32 %v245, %v246
    %251 = vadd.xlane.f32.xlu0 %v250
    %v252 = vpop.xlane.xlu0 %251
    %v253 = vmax.f32 %v243, %v244
    %254 = vmax.xlane.f32.xlu0 %v253
    %v255 = vpop.xlane.xlu0 %254
    %v256 = vmax.f32 %v245, %v246
    %257 = vmax.xlane.f32.xlu0 %v256
    %v258 = vpop.xlane.xlu0 %257
    %v259 = vmul.f32 %v249, 0.00390625
    %v260 = vmul.f32 %v252, 0.00390625
    %v261 = vsel %vm49, %v259, %v255
    %v262 = vsel %vm49, %v260, %v258
    %v263 = vld [vmem:[%s1] sm:$0x3]
    %v264 = vld [vmem:[%s2] sm:$0xff]
    %v265 = vld [vmem:[%s2 + $0x8] sm:$0xff]
    %v267 = vsel %vm55, %v263, 0
    %269 = vmatprep.subr.mxu0 0.0
    %270 = vmatpush1.msra.mxu0 %v261
    %271 = vmatprep.subr.mxu0 0.0
    %272 = vmatpush1.msra.mxu0 %v262
    %273 = vmatprep.subr.mxu0 0.0
    %274 = vmatpush1.msra.mxu0 0.0
    %275 = vmatprep.subr.mxu0 0.0
    %276 = vmatpush1.msra.mxu0 0.0
    %277 = vmatprep.subr.mxu0 0.0
    %278 = vmatpush1.msra.mxu0 0.0
    %279 = vmatprep.subr.mxu0 0.0
    %280 = vmatpush1.msra.mxu0 0.0
    %281 = vmatprep.subr.mxu0 0.0
    %282 = vmatpush1.msra.mxu0 0.0
    %283 = vmatprep.subr.mxu0 0.0
    %284 = vmatpush1.msra.mxu0 0.0
    %285 = vmatprep.subr.mxu0 0.0
    %286 = vmatpush1.msra.mxu0 0.0
    %287 = vmatprep.subr.mxu0 0.0
    %288 = vmatpush1.msra.mxu0 0.0
    %289 = vmatprep.subr.mxu0 0.0
    %290 = vmatpush1.msra.mxu0 0.0
    %291 = vmatprep.subr.mxu0 0.0
    %292 = vmatpush1.msra.mxu0 0.0
    %293 = vmatprep.subr.mxu0 0.0
    %294 = vmatpush1.msra.mxu0 0.0
    %295 = vmatprep.subr.mxu0 0.0
    %296 = vmatpush1.msra.mxu0 0.0
    %297 = vmatprep.subr.mxu0 0.0
    %298 = vmatpush1.msra.mxu0 0.0
    %299 = vmatprep.subr.mxu0 0.0
    %300 = vmatpush1.msra.mxu0 0.0
    %301 = vmatprep.subr.mxu0 0.0
    %302 = vmatpush1.msra.mxu0 0.0
    %303 = vmatprep.subr.mxu0 0.0
    %304 = vmatpush1.msra.mxu0 0.0
    %305 = vmatprep.subr.mxu0 0.0
    %306 = vmatpush1.msra.mxu0 0.0
    %307 = vmatprep.subr.mxu0 0.0
    %308 = vmatpush1.msra.mxu0 0.0
    %309 = vmatprep.subr.mxu0 0.0
    %310 = vmatpush1.msra.mxu0 0.0
    %311 = vmatprep.subr.mxu0 0.0
    %312 = vmatpush1.msra.mxu0 0.0
    %313 = vmatprep.subr.mxu0 0.0
    %314 = vmatpush1.msra.mxu0 0.0
    %315 = vmatprep.subr.mxu0 0.0
    %316 = vmatpush1.msra.mxu0 0.0
    %317 = vmatprep.subr.mxu0 0.0
    %318 = vmatpush1.msra.mxu0 0.0
    %319 = vmatprep.subr.mxu0 0.0
    %320 = vmatpush1.msra.mxu0 0.0
    %321 = vmatprep.subr.mxu0 0.0
    %322 = vmatpush1.msra.mxu0 0.0
    %323 = vmatprep.subr.mxu0 0.0
    %324 = vmatpush1.msra.mxu0 0.0
    %325 = vmatprep.subr.mxu0 0.0
    %326 = vmatpush1.msra.mxu0 0.0
    %327 = vmatprep.subr.mxu0 0.0
    %328 = vmatpush1.msra.mxu0 0.0
    %329 = vmatprep.subr.mxu0 0.0
    %330 = vmatpush1.msra.mxu0 0.0
    %331 = vmatprep.subr.mxu0 0.0
    %332 = vmatpush1.msra.mxu0 0.0
    %333 = vmatprep.mubr.f32.mxu0 0.0
    %334 = vmatmul.mubr.f32.gmra.mrb[0].mxu0 %v267
    %v335 = vpop.f32.mrb[0].mxu0
    %v336 = vadd.f32 0.0, %v335
    %v337 = vpop.f32.mrb[0].mxu0
    %338 = vdwg.mxu0
    %v339 = vmax.f32 %v336, 0.0
    %v341 = vsel %vm130, %v264, 0
    %v344 = vsel %vm130, %v265, 0
    %v347 = vsel %vm137, %v339, 0
    %349 = vmatprep.subr.mxu0 0.0
    %350 = vmatpush1.msra.mxu0 %v347
    %351 = vmatprep.subr.mxu0 0.0
    %352 = vmatpush1.msra.mxu0 0.0
    %353 = vmatprep.subr.mxu0 0.0
    %354 = vmatpush1.msra.mxu0 0.0
    %355 = vmatprep.subr.mxu0 0.0
    %356 = vmatpush1.msra.mxu0 0.0
    %357 = vmatprep.subr.mxu0 0.0
    %358 = vmatpush1.msra.mxu0 0.0
    %359 = vmatprep.subr.mxu0 0.0
    %360 = vmatpush1.msra.mxu0 0.0
    %361 = vmatprep.subr.mxu0 0.0
    %362 = vmatpush1.msra.mxu0 0.0
    %363 = vmatprep.subr.mxu0 0.0
    %364 = vmatpush1.msra.mxu0 0.0
    %365 = vmatprep.subr.mxu0 0.0
    %366 = vmatpush1.msra.mxu0 0.0
    %367 = vmatprep.subr.mxu0 0.0
    %368 = vmatpush1.msra.mxu0 0.0
    %369 = vmatprep.subr.mxu0 0.0
    %370 = vmatpush1.msra.mxu0 0.0
    %371 = vmatprep.subr.mxu0 0.0
    %372 = vmatpush1.msra.mxu0 0.0
    %373 = vmatprep.subr.mxu0 0.0
    %374 = vmatpush1.msra.mxu0 0.0
    %375 = vmatprep.subr.mxu0 0.0
    %376 = vmatpush1.msra.mxu0 0.0
    %377 = vmatprep.subr.mxu0 0.0
    %378 = vmatpush1.msra.mxu0 0.0
    %379 = vmatprep.subr.mxu0 0.0
    %380 = vmatpush1.msra.mxu0 0.0
    %381 = vmatprep.subr.mxu0 0.0
    %382 = vmatpush1.msra.mxu0 0.0
    %383 = vmatprep.subr.mxu0 0.0
    %384 = vmatpush1.msra.mxu0 0.0
    %385 = vmatprep.subr.mxu0 0.0
    %386 = vmatpush1.msra.mxu0 0.0
    %387 = vmatprep.subr.mxu0 0.0
    %388 = vmatpush1.msra.mxu0 0.0
    %389 = vmatprep.subr.mxu0 0.0
    %390 = vmatpush1.msra.mxu0 0.0
    %391 = vmatprep.subr.mxu0 0.0
    %392 = vmatpush1.msra.mxu0 0.0
    %393 = vmatprep.subr.mxu0 0.0
    %394 = vmatpush1.msra.mxu0 0.0
    %395 = vmatprep.subr.mxu0 0.0
    %396 = vmatpush1.msra.mxu0 0.0
    %397 = vmatprep.subr.mxu0 0.0
    %398 = vmatpush1.msra.mxu0 0.0
    %399 = vmatprep.subr.mxu0 0.0
    %400 = vmatpush1.msra.mxu0 0.0
    %401 = vmatprep.subr.mxu0 0.0
    %402 = vmatpush1.msra.mxu0 0.0
    %403 = vmatprep.subr.mxu0 0.0
    %404 = vmatpush1.msra.mxu0 0.0
    %405 = vmatprep.subr.mxu0 0.0
    %406 = vmatpush1.msra.mxu0 0.0
    %407 = vmatprep.subr.mxu0 0.0
    %408 = vmatpush1.msra.mxu0 0.0
    %409 = vmatprep.subr.mxu0 0.0
    %410 = vmatpush1.msra.mxu0 0.0
    %411 = vmatprep.subr.mxu0 0.0
    %412 = vmatpush1.msra.mxu0 0.0
    %413 = vmatprep.mubr.f32.mxu0 0.0
    %414 = vmatmul.mubr.f32.gmra.mrb[0].mxu0 %v341
    %v415 = vpop.f32.mrb[0].mxu0
    %v416 = vadd.f32 0.0, %v415
    %v417 = vpop.f32.mrb[0].mxu0
    %418 = vmatprep.mubr.f32.mxu0 0.0
    %419 = vmatmul.mubr.f32.gmra.mrb[0].mxu0 %v344
    %v420 = vpop.f32.mrb[0].mxu0
    %v421 = vadd.f32 0.0, %v420
    %v422 = vpop.f32.mrb[0].mxu0
    %423 = vdwg.mxu0
    %v424 = vsel %vm130, %v416, 0.0
    %425 = vadd.xlane.f32.xlu0 %v424
    %v426 = vpop.xlane.xlu0 %425
    %v427 = vsel %vm130, %v421, 0.0
    %428 = vadd.xlane.f32.xlu0 %v427
    %v429 = vpop.xlane.xlu0 %428
    %v430 = vxor.u32 %v426, 2147483648
    %v431 = vxor.u32 %v429, 2147483648
    %v432 = vmul.f32 %v430, 1.442695
    %v433 = vpow.pop %v432
    %v434 = vmul.f32 %v431, 1.442695
    %v435 = vpow.pop %v434
    %v436 = vadd.f32 %v433, 1.0
    %v437 = vadd.f32 %v435, 1.0
    %v438 = vrcp.pop %v436
    %v439 = vmul.f32 1.0, %v438
    %v440 = vrcp.pop %v437
    %v441 = vmul.f32 1.0, %v440
    %v442 = vmul.f32 %v243, %v439
    %v443 = vmul.f32 %v244, %v439
    %v444 = vmul.f32 %v245, %v441
    %v445 = vmul.f32 %v246, %v441
    %s446 = scalar_lea.vmem [#allocation5], 32
    %447 = vst [vmem:[%s446] sm:$0xff] %v442
    %448 = vst [vmem:[%s446 + $0x8] sm:$0xff] %v443
    %449 = vst [vmem:[%s446 + $0x10] sm:$0xff] %v444
    %450 = vst [vmem:[%s446 + $0x18] sm:$0xff] %v445
    // Predicated region
    $region18: #{tpu_custom_call.1} parent=1 // pred_check
      _
    $region19: #{tpu_custom_call.1} parent=1 // pred_check_branch
      %452 = sbr.rel (0) target = $region21
    $region20: #{tpu_custom_call.1} parent=1 // pred_region
      %s454 = ssub.s32 1024, 1024
      %455 = vsyncadd [#allocation4], %s454
      %s456 = sshll.u32 [#allocation5], 4
      %s457 = int_to_ptr.vmem [resolvable:$true] %s456
      %462 = dma.vmem_to_hbm [thread:$0]  %s457, 1024, %s3, [#allocation4], 256, 256, 16
    $region21: #{tpu_custom_call.1} parent=1 // pred_fallthru
      _
    // Predicated region
    $region22: #{tpu_custom_call.1} parent=1 // pred_check
      _
    $region23: #{tpu_custom_call.1} parent=1 // pred_check_branch
      %464 = sbr.rel (0) target = $region25
    $region24: #{tpu_custom_call.1} parent=1 // pred_region
      %465 = dma.done [#allocation4], 1024
    $region25: #{tpu_custom_call.1} parent=1 // pred_fallthru
      _
    %466 = vsyncpa [#allocation3], 1
    %467 = vsyncpa [#allocation4], 1

</llo_original>
